<compile_context>
chip_gen: v7x
topology: tpu7x:2x2x1
jax: 0.10.0
libtpu: 0.0.40
codegen_flags: <defaults>
</compile_context>

<pallas_src>
import functools

import jax
import jax.numpy as jnp
from jax import lax
from jax.experimental import pallas as pl
from jax.experimental.pallas import tpu as pltpu


LANES = 128
SUBLANE_ALIGN = 32  # covers f32 (8), bf16 (16) and int8 (32) sublane tiling


def _round_up(x, m):
    return ((x + m - 1) // m) * m


def _make_pow(gamma):
    """base**gamma, specialized for non-negative integer gamma (VPU only)."""
    g = float(gamma)
    if g == int(g) and int(g) >= 0:
        gi = int(g)
        if gi == 0:
            return lambda b: jnp.ones_like(b)
        if gi == 1:
            return lambda b: b
        return lambda b: lax.integer_pow(b, gi)   # repeated multiplies (VPU)
    return lambda b: b ** g                        # fractional gamma fallback


def _make_kernel(gamma, alpha, tile_r, tiles_per_split, n_rows):
    powf = _make_pow(gamma)
    alpha = float(alpha)

    def kernel(x_ref, sel_ref, acc_ref):
        s = pl.program_id(0)   # optional split axis (parallel)
        i = pl.program_id(1)   # reduction axis (last)

        @pl.when(i == 0)
        def _():
            acc_ref[...] = jnp.zeros_like(acc_ref)

        x = x_ref[...].astype(jnp.float32)       # (tile_r, 128), lane-dense
        sel = sel_ref[...].astype(jnp.int32)     # (tile_r, 128) in {0,1,2}

        # Logical (unclamped) row position -> mask for tail / overshoot blocks.
        row0 = (s * tiles_per_split + i) * tile_r
        rows = row0 + lax.broadcasted_iota(jnp.int32, x.shape, 0)
        in_bounds = rows < n_rows

        # One shared exp: e = exp(-|x|); sigmoid and both stable log terms
        # reuse it (saves one transcendental per element on the single EUP).
        e = jnp.exp(-jnp.abs(x))
        r = 1.0 / (1.0 + e)
        er = e * r
        nonneg = x >= 0.0
        p = jnp.where(nonneg, r, er)             # sigmoid(x)
        one_m_p = jnp.where(nonneg, er, r)       # 1 - sigmoid(x)
        softplus = jnp.log1p(e)                  # log(1 + exp(-|x|))
        log_p = jnp.minimum(x, 0.0) - softplus   # log(sigmoid(x))
        log_1mp = jnp.minimum(-x, 0.0) - softplus

        term1 = powf(one_m_p) * log_p            # (1-p)^gamma * log(p)
        term2 = powf(p) * log_1mp                # p^gamma * log(1-p)

        # Selector: 1 = positive class, 2 = negative, 0 = ignore / padding.
        pos = in_bounds & (sel == 1)
        neg = in_bounds & (sel == 2)
        loss = jnp.where(pos, (-alpha) * term1,
                         jnp.where(neg, (alpha - 1.0) * term2, 0.0))

        # Sublane reduction -> small (1, 128) accumulator resident across grid.
        acc_ref[...] += jnp.sum(loss, axis=0, keepdims=True)[None]

    return kernel


@functools.partial(jax.jit,
                   static_argnames=("gamma", "alpha", "tile_rows", "num_splits"))
def sigmoid_focal_loss(out, target, gamma=2.0, alpha=0.25,
                       tile_rows=2048, num_splits=1):
    """out: (N, C) float logits (f32 or bf16 pass-through), target: (N,) int labels.

    Returns the scalar f32 focal-loss sum (matches the PyTorch reference).
    """
    N, C = out.shape
    total = N * C

    # Tiny per-(anchor, class) selector: 1=positive, 2=negative, 0=ignore.
    cls = jnp.arange(1, C + 1, dtype=jnp.int32)[None, :]
    t = target.astype(jnp.int32)[:, None]
    sel = jnp.where(t == cls, jnp.int8(1),
                    jnp.where(t >= 0, jnp.int8(2), jnp.int8(0)))   # (N, C) int8

    # Flat lane-dense view (free row-major bitcast when N*C % 128 == 0).
    n_rows = pl.cdiv(total, LANES)
    if total % LANES == 0:
        x2 = out.reshape(n_rows, LANES)
        sel2 = sel.reshape(n_rows, LANES)
    else:
        # TODO(synk): this fallback pads the flat logits (one extra HBM pass);
        # avoid by having the producer emit an N*C that is a multiple of 128.
        pad = n_rows * LANES - total
        x2 = jnp.pad(out.reshape(-1), (0, pad)).reshape(n_rows, LANES)
        sel2 = jnp.pad(sel.reshape(-1), (0, pad)).reshape(n_rows, LANES)

    # Tile rows (sublane dim): ~1 MiB f32 per step by default; use full extent
    # when the whole problem fits a single block.
    tile_r = _round_up(int(tile_rows), SUBLANE_ALIGN)
    if tile_r >= n_rows:
        tile_r = n_rows
    tiles_total = pl.cdiv(n_rows, tile_r)
    splits = max(1, int(num_splits))
    tiles_per_split = pl.cdiv(tiles_total, splits)

    def row_map(s, i):
        tile = s * tiles_per_split + i
        # Clamp so overshoot steps DMA a valid (duplicate) block; the kernel's
        # unclamped row mask zeroes their contribution.
        return (jnp.minimum(tile, tiles_total - 1), 0)

    kernel = _make_kernel(float(gamma), float(alpha),
                          tile_r, tiles_per_split, n_rows)

    elems = n_rows * LANES
    cost = pl.CostEstimate(
        flops=22 * elems,
        transcendentals=3 * elems,
        bytes_accessed=elems * (out.dtype.itemsize + 1) + splits * LANES * 4,
    )

    # TODO(synk): on v7x, run with num_splits=2 and verify in a profile that
    # the leading axis shards across both TensorCores (switch its semantics
    # to pltpu.CORE_PARALLEL if plain "parallel" does not split codegen).
    partials = pl.pallas_call(
        kernel,
        out_shape=jax.ShapeDtypeStruct((splits, 1, LANES), jnp.float32),
        grid_spec=pltpu.PrefetchScalarGridSpec(
            num_scalar_prefetch=0,
            grid=(splits, tiles_per_split),
            in_specs=[
                pl.BlockSpec((tile_r, LANES), row_map),   # logits (lane-dense)
                pl.BlockSpec((tile_r, LANES), row_map),   # int8 selector
            ],
            # Output block constant across the reduction axis -> resident
            # (1, 1, 128) VMEM accumulator per split.
            out_specs=pl.BlockSpec((1, 1, LANES), lambda s, i: (s, 0, 0)),
        ),
        compiler_params=pltpu.CompilerParams(
            dimension_semantics=("parallel", "arbitrary"),
        ),
        cost_estimate=cost,
    )(x2, sel2)

    # Single tiny cross-lane reduction outside the kernel.
    return jnp.sum(partials)


def _reference(out, target, gamma, alpha):
    # Pure-JAX reference mirroring the PyTorch forward exactly.
    n_class = out.shape[1]
    class_ids = jnp.arange(1, n_class + 1, dtype=target.dtype)[None, :]
    t = target[:, None]
    p = jax.nn.sigmoid(out.astype(jnp.float32))
    term1 = (1 - p) ** gamma * jnp.log(p)
    term2 = p ** gamma * jnp.log(1 - p)
    loss = (-(t == class_ids).astype(jnp.float32) * alpha * term1
            - ((t != class_ids) & (t >= 0)).astype(jnp.float32) * (1 - alpha) * term2)
    return loss.sum()


if __name__ == "__main__":
    gamma, alpha = 2.0, 0.25

    N, C = 64, 10  # N anchors, C classes (small test shapes)
    key = jax.random.PRNGKey(0)
    k1, k2 = jax.random.split(key)
    out = jax.random.normal(k1, (N, C), dtype=jnp.float32)
    # labels in {-1, 0, 1..C}: -1 ignored, 0 "background" (negative for all classes)
    target = jax.random.randint(k2, (N,), -1, C + 1, dtype=jnp.int32)

    loss = sigmoid_focal_loss(out, target, gamma=gamma, alpha=alpha)
    loss = jax.block_until_ready(loss)

    ref = _reference(out, target, gamma, alpha)
    assert jnp.allclose(loss, ref, rtol=1e-4, atol=1e-4), (loss, ref)

    print("KERNEL_OK")
</pallas_src>

<mosaic_0001>
module attributes {stable_mosaic.version = 11 : i64} {
  func.func @kernel(%arg0: i32, %arg1: i32, %arg2: memref<5x128xf32, #tpu.memory_space<vmem>>, %arg3: memref<5x128xi8, #tpu.memory_space<vmem>>, %arg4: memref<1x1x128xf32, #tpu.memory_space<vmem>>) attributes {dimension_semantics = [#tpu.dimension_semantics<parallel>, #tpu.dimension_semantics<arbitrary>], iteration_bounds = array<i64: 1, 1>, scalar_prefetch = 0 : i64, scratch_operands = 0 : i64, tpu.core_type = #tpu.core_type<tc>, window_params = [{transform_indices = @transform_0, window_bounds = array<i64: 5, 128>}, {transform_indices = @transform_1, window_bounds = array<i64: 5, 128>}, {transform_indices = @transform_2, window_bounds = array<i64: 1, 1, 128>}]} {
    %c0_i32 = arith.constant 0 : i32
    %0 = arith.cmpi eq, %arg1, %c0_i32 : i32
    %1 = arith.extui %0 : i1 to i32
    %c0_i32_0 = arith.constant 0 : i32
    %2 = arith.cmpi ne, %1, %c0_i32_0 : i32
    scf.if %2 {
      %cst_22 = arith.constant 0.000000e+00 : f32
      %59 = vector.broadcast %cst_22 : f32 to vector<1x1x128xf32>
      %c0_23 = arith.constant 0 : index
      %c0_24 = arith.constant 0 : index
      %c0_25 = arith.constant 0 : index
      %60 = vector.load %arg4[%c0_23, %c0_24, %c0_25] : memref<1x1x128xf32, #tpu.memory_space<vmem>>, vector<1x1x128xf32>
      tpu.vector_store %arg4[%c0_23, %c0_24, %c0_25], %59 {strides = array<i32>} : memref<1x1x128xf32, #tpu.memory_space<vmem>>, vector<1x1x128xf32>,
    } else {
    }
    %c0 = arith.constant 0 : index
    %c0_1 = arith.constant 0 : index
    %3 = vector.load %arg2[%c0, %c0_1] : memref<5x128xf32, #tpu.memory_space<vmem>>, vector<5x128xf32>
    %c0_2 = arith.constant 0 : index
    %c0_3 = arith.constant 0 : index
    %4 = vector.load %arg3[%c0_2, %c0_3] : memref<5x128xi8, #tpu.memory_space<vmem>>, vector<5x128xi8>
    %5 = arith.extsi %4 : vector<5x128xi8> to vector<5x128xi32>
    %c1_i32 = arith.constant 1 : i32
    %6 = arith.muli %arg0, %c1_i32 : i32
    %7 = arith.addi %6, %arg1 : i32
    %c5_i32 = arith.constant 5 : i32
    %8 = arith.muli %7, %c5_i32 : i32
    %9 = tpu.iota {dimensions = array<i32: 0>} : vector<5x128xi32>
    %10 = vector.broadcast %8 : i32 to vector<5x128xi32>
    %11 = arith.addi %10, %9 : vector<5x128xi32>
    %c5_i32_4 = arith.constant 5 : i32
    %12 = vector.broadcast %c5_i32_4 : i32 to vector<5x128xi32>
    %13 = arith.cmpi slt, %11, %12 : vector<5x128xi32>
    %14 = math.absf %3 : vector<5x128xf32>
    %cst = arith.constant 0.000000e+00 : f32
    %15 = vector.broadcast %cst : f32 to vector<5x128xf32>
    %16 = arith.subf %15, %14 : vector<5x128xf32>
    %17 = math.exp %16 : vector<5x128xf32>
    %cst_5 = arith.constant 1.000000e+00 : f32
    %18 = vector.broadcast %cst_5 : f32 to vector<5x128xf32>
    %19 = arith.addf %18, %17 : vector<5x128xf32>
    %cst_6 = arith.constant 1.000000e+00 : f32
    %20 = vector.broadcast %cst_6 : f32 to vector<5x128xf32>
    %21 = arith.divf %20, %19 : vector<5x128xf32>
    %22 = arith.mulf %17, %21 : vector<5x128xf32>
    %cst_7 = arith.constant 0.000000e+00 : f32
    %23 = vector.broadcast %cst_7 : f32 to vector<5x128xf32>
    %24 = arith.cmpf oge, %3, %23 : vector<5x128xf32>
    %25 = arith.select %24, %21, %22 : vector<5x128xi1>, vector<5x128xf32>
    %26 = arith.select %24, %22, %21 : vector<5x128xi1>, vector<5x128xf32>
    %27 = math.log1p %17 : vector<5x128xf32>
    %cst_8 = arith.constant 0.000000e+00 : f32
    %28 = vector.broadcast %cst_8 : f32 to vector<5x128xf32>
    %29 = arith.minimumf %3, %28 : vector<5x128xf32>
    %30 = arith.subf %29, %27 : vector<5x128xf32>
    %cst_9 = arith.constant 0.000000e+00 : f32
    %31 = vector.broadcast %cst_9 : f32 to vector<5x128xf32>
    %32 = arith.subf %31, %3 : vector<5x128xf32>
    %cst_10 = arith.constant 0.000000e+00 : f32
    %33 = vector.broadcast %cst_10 : f32 to vector<5x128xf32>
    %34 = arith.minimumf %32, %33 : vector<5x128xf32>
    %35 = arith.subf %34, %27 : vector<5x128xf32>
    %36 = arith.mulf %26, %26 : vector<5x128xf32>
    %37 = arith.mulf %36, %30 : vector<5x128xf32>
    %38 = arith.mulf %25, %25 : vector<5x128xf32>
    %39 = arith.mulf %38, %35 : vector<5x128xf32>
    %c1_i32_11 = arith.constant 1 : i32
    %40 = vector.broadcast %c1_i32_11 : i32 to vector<5x128xi32>
    %41 = arith.cmpi eq, %5, %40 : vector<5x128xi32>
    %42 = arith.andi %13, %41 : vector<5x128xi1>
    %c2_i32 = arith.constant 2 : i32
    %43 = vector.broadcast %c2_i32 : i32 to vector<5x128xi32>
    %44 = arith.cmpi eq, %5, %43 : vector<5x128xi32>
    %45 = arith.andi %13, %44 : vector<5x128xi1>
    %cst_12 = arith.constant -2.500000e-01 : f32
    %46 = vector.broadcast %cst_12 : f32 to vector<5x128xf32>
    %47 = arith.mulf %46, %37 : vector<5x128xf32>
    %cst_13 = arith.constant -7.500000e-01 : f32
    %48 = vector.broadcast %cst_13 : f32 to vector<5x128xf32>
    %49 = arith.mulf %48, %39 : vector<5x128xf32>
    %cst_14 = arith.constant 0.000000e+00 : f32
    %50 = vector.broadcast %cst_14 : f32 to vector<5x128xf32>
    %51 = arith.select %45, %49, %50 : vector<5x128xi1>, vector<5x128xf32>
    %52 = arith.select %42, %47, %51 : vector<5x128xi1>, vector<5x128xf32>
    %c0_15 = arith.constant 0 : index
    %c0_16 = arith.constant 0 : index
    %c0_17 = arith.constant 0 : index
    %53 = vector.load %arg4[%c0_15, %c0_16, %c0_17] : memref<1x1x128xf32, #tpu.memory_space<vmem>>, vector<1x1x128xf32>
    %cst_18 = arith.constant dense<0.000000e+00> : vector<128xf32>
    %54 = vector.multi_reduction <add>, %52, %cst_18 [0] : vector<5x128xf32> to vector<128xf32>
    %55 = vector.shape_cast %54 : vector<128xf32> to vector<1x128xf32>
    %56 = vector.shape_cast %55 : vector<1x128xf32> to vector<1x1x128xf32>
    %57 = arith.addf %53, %56 : vector<1x1x128xf32>
    %c0_19 = arith.constant 0 : index
    %c0_20 = arith.constant 0 : index
    %c0_21 = arith.constant 0 : index
    %58 = vector.load %arg4[%c0_19, %c0_20, %c0_21] : memref<1x1x128xf32, #tpu.memory_space<vmem>>, vector<1x1x128xf32>
    tpu.vector_store %arg4[%c0_19, %c0_20, %c0_21], %57 {strides = array<i32>} : memref<1x1x128xf32, #tpu.memory_space<vmem>>, vector<1x1x128xf32>,
    return
  }
  func.func @transform_0(%arg0: i32, %arg1: i32) -> (i32, i32) {
    %c1_i32 = arith.constant 1 : i32
    %0 = arith.muli %arg0, %c1_i32 : i32
    %1 = arith.addi %0, %arg1 : i32
    %c0_i32 = arith.constant 0 : i32
    %2 = arith.minsi %1, %c0_i32 : i32
    %c0_i32_0 = arith.constant 0 : i32
    %c0_i32_1 = arith.constant 0 : i32
    return %2, %c0_i32_0 : i32, i32
  }
  func.func @transform_1(%arg0: i32, %arg1: i32) -> (i32, i32) {
    %c1_i32 = arith.constant 1 : i32
    %0 = arith.muli %arg0, %c1_i32 : i32
    %1 = arith.addi %0, %arg1 : i32
    %c0_i32 = arith.constant 0 : i32
    %2 = arith.minsi %1, %c0_i32 : i32
    %c0_i32_0 = arith.constant 0 : i32
    %c0_i32_1 = arith.constant 0 : i32
    return %2, %c0_i32_0 : i32, i32
  }
  func.func @transform_2(%arg0: i32, %arg1: i32) -> (i32, i32, i32) {
    %c0_i32 = arith.constant 0 : i32
    %c0_i32_0 = arith.constant 0 : i32
    %c0_i32_1 = arith.constant 0 : i32
    return %arg0, %c0_i32, %c0_i32_0 : i32, i32, i32
  }
}

</mosaic_0001>

<llo_original>
// kernel: sigmoid_focal_loss.1
$region0: #{sigmoid_focal_loss.1}
  #allocation0 [shape = 'u32[]', space=smem, size = 0x4, offset = 0x4, fixed_abs, tag = 'smem constant byte address 0x4 - core index']
  #allocation1 [shape = 'u32[144,128]{1,0:T(1,128)}', space=vmem, size = 0x12000, scoped, tag = 'internal scratch']
  %s0 = inlined_call_operand.vmem [shape: f32[5,128], index: 0, kind: input, shape index: {}]
  %s1 = inlined_call_operand.vmem [shape: s8[5,128], index: 1, kind: input, shape index: {}]
  %s2 = inlined_call_operand.vmem [shape: f32[1,1,128], index: 2, kind: output, shape index: {}]
  %s3 = sld [smem:[#allocation0]]
  $region22: #{sigmoid_focal_loss.1} parent=0
    _
  %s5 = ssub.s32 1, %s3
  %s6 = scalar_select 0, %s5, %s3
  // Predicated region
  $region2: #{sigmoid_focal_loss.1} parent=0 // pred_check
    _
  $region3: #{sigmoid_focal_loss.1} parent=0 // pred_check_branch
    %8 = sbr.rel (0) target = $region5
  $region4: #{sigmoid_focal_loss.1} parent=0 // pred_region
    %s9 = sadd.s32 0, 0
    %p10 = scmp.lt.s32.totalorder %s9, 0
    %s11 = scalar_select %p10, %s9, 0
    %p12 = scmp.lt.s32.totalorder %s11, 0
    %s13 = scalar_select %p12, %s11, 0
    %s14 = smul.addr %s13, 8
    %s15 = scalar_lea.vmem %s0, %s14
    %s16 = sadd.s32 0, 0
    %p17 = scmp.lt.s32.totalorder %s16, 0
    %s18 = scalar_select %p17, %s16, 0
  $region5: #{sigmoid_focal_loss.1} parent=0 // pred_fallthru
    _
  // Predicated region
  $region6: #{sigmoid_focal_loss.1} parent=0 // pred_check
    _
  $region7: #{sigmoid_focal_loss.1} parent=0 // pred_check_branch
    %20 = sbr.rel (0) target = $region9
  $region8: #{sigmoid_focal_loss.1} parent=0 // pred_region
    %s21 = sadd.s32 0, 0
    %p22 = scmp.lt.s32.totalorder %s21, 0
    %s23 = scalar_select %p22, %s21, 0
    %p24 = scmp.lt.s32.totalorder %s23, 0
    %s25 = scalar_select %p24, %s23, 0
    %s26 = smul.addr %s25, 2
    %s27 = scalar_lea.vmem %s1, %s26
    %s28 = sadd.s32 0, 0
    %p29 = scmp.lt.s32.totalorder %s28, 0
    %s30 = scalar_select %p29, %s28, 0
  $region9: #{sigmoid_focal_loss.1} parent=0 // pred_fallthru
    _
  %s31 = sadd.s32 0, 0
  %p32 = scmp.lt.s32.totalorder %s31, 0
  %s33 = scalar_select %p32, %s31, 0
  %p34 = scmp.lt.s32.totalorder %s33, 0
  %s35 = scalar_select %p34, %s33, 0
  %s36 = smul.addr %s35, 8
  %s37 = scalar_lea.vmem %s0, %s36
  %s38 = sadd.s32 0, 0
  %p39 = scmp.lt.s32.totalorder %s38, 0
  %s40 = scalar_select %p39, %s38, 0
  %p41 = scmp.lt.s32.totalorder %s40, 0
  %s42 = scalar_select %p41, %s40, 0
  %s43 = smul.addr %s42, 2
  %s44 = scalar_lea.vmem %s1, %s43
  %s45 = sadd.s32 0, 0
  %p46 = scmp.lt.s32.totalorder %s45, 0
  %s47 = scalar_select %p46, %s45, 0
  %p48 = scmp.lt.s32.totalorder %s47, 0
  %s49 = scalar_select %p48, %s47, 0
  %s50 = smul.addr %s49, 8
  %s51 = scalar_lea.vmem %s0, %s50
  %s52 = sadd.s32 0, 0
  %p53 = scmp.lt.s32.totalorder %s52, 0
  %s54 = scalar_select %p53, %s52, 0
  %s55 = sadd.s32 0, 0
  %p56 = scmp.lt.s32.totalorder %s55, 0
  %s57 = scalar_select %p56, %s55, 0
  %p58 = scmp.lt.s32.totalorder %s57, 0
  %s59 = scalar_select %p58, %s57, 0
  %s60 = smul.addr %s59, 2
  %s61 = scalar_lea.vmem %s1, %s60
  %s62 = sadd.s32 0, 0
  %p63 = scmp.lt.s32.totalorder %s62, 0
  %s64 = scalar_select %p63, %s62, 0
  %p65 = scmp.eq.s32.totalorder 0, 0
  // Predicated region
  $region10: #{sigmoid_focal_loss.1} parent=0 // pred_check
    %p66 = pneg %p65
  $region11: #{sigmoid_focal_loss.1} parent=0 // pred_check_branch
    %68 = sbr.rel (%p66) target = $region13
  $region12: #{sigmoid_focal_loss.1} parent=0 // pred_region
    %69 = vst [vmem:[%s2] sm:$0x1] 0.0
  $region13: #{sigmoid_focal_loss.1} parent=0 // pred_fallthru
    _
  %v70 = vld [vmem:[%s51] sm:$0x1f]
  %v71 = vld [vmem:[%s61] sm:$0x3]
  %v72 = vunpack.c.0.s8 %v71
  %s73 = sadd.s32 0, 0
  %s74 = smul.u32 %s73, 5
  %v75 = vlaneseq
  %v76 = vshrl.u32 %v75, 7
  %v77 = vstv %s74
  %v78 = vadd.s32 %v77, %v76
  %vm79 = vcmp.lt.s32.totalorder %v78, 5
  %v80 = vand.u32 2147483647, %v70
  %v81 = vsub.f32 0.0, %v80
  %v82 = vmul.f32 %v81, 1.442695
  %v83 = vpow.pop %v82
  %v84 = vadd.f32 %v83, 1.0
  %v85 = vrcp.pop %v84
  %v86 = vmul.f32 1.0, %v85
  %v87 = vmul.f32 %v83, %v86
  %vm88 = vcmp.ge.f32.partialorder %v70, 0.0
  %v89 = vsel %vm88, %v86, %v87
  %v90 = vsel %vm88, %v87, %v86
  %v91 = vadd.f32 %v83, 1.0
  %v92 = vlog2.pop %v91
  %v93 = vmul.f32 %v92, 0.6931472
  %v94 = vmul.f32 -0.5, %v83
  %v95 = vadd.f32 %v94, 1.0
  %v96 = vmul.f32 %v95, %v83
  %v97 = vand.u32 2147483647, %v83
  %vm98 = vcmp.lt.f32.partialorder %v97, 0.0004427343
  %v99 = vsel %vm98, %v96, %v93
  %v100 = vmin.f32 %v70, 0.0
  %v101 = vsub.f32 %v100, %v99
  %v102 = vsub.f32 0.0, %v70
  %v103 = vmin.f32 %v102, 0.0
  %v104 = vsub.f32 %v103, %v99
  %v105 = vmul.f32 %v90, %v90
  %v106 = vmul.f32 %v105, %v101
  %v107 = vmul.f32 %v89, %v89
  %v108 = vmul.f32 %v107, %v104
  %vm109 = vcmp.eq.s32.totalorder %v72, 1
  %vm110 = vmand %vm79, %vm109
  %vm111 = vcmp.eq.s32.totalorder %v72, 2
  %vm112 = vmand %vm79, %vm111
  %v113 = vmul.f32 %v106, -0.25
  %v114 = vmul.f32 %v108, -0.75
  %v115 = vsel %vm112, %v114, 0.0
  %v116 = vsel %vm110, %v113, %v115
  %v117 = vld [vmem:[%s2] sm:$0x1]
  %vm118 = vcmask 1044480
  %v119 = vsel %vm118, %v116, 0.0
  %v120 = vrot.slane %v119, 4
  %v121 = vadd.f32 %v119, %v120
  %v122 = vrot.slane %v121, 2
  %v123 = vadd.f32 %v121, %v122
  %v124 = vrot.slane %v123, 1
  %v125 = vadd.f32 %v123, %v124
  %v126 = vadd.f32 %v117, %v125
  %127 = vst [vmem:[%s2] sm:$0x1] %v126
  // Predicated region
  $region14: #{sigmoid_focal_loss.1} parent=0 // pred_check
    _
  $region15: #{sigmoid_focal_loss.1} parent=0 // pred_check_branch
    %129 = sbr.rel (0) target = $region17
  $region16: #{sigmoid_focal_loss.1} parent=0 // pred_region
    _
  $region17: #{sigmoid_focal_loss.1} parent=0 // pred_fallthru
    _
  // Predicated region
  $region18: #{sigmoid_focal_loss.1} parent=0 // pred_check
    _
  $region19: #{sigmoid_focal_loss.1} parent=0 // pred_check_branch
    %131 = sbr.rel (0) target = $region21
  $region20: #{sigmoid_focal_loss.1} parent=0 // pred_region
    _
  $region21: #{sigmoid_focal_loss.1} parent=0 // pred_fallthru
    _

</llo_original>
